<compile_context>
chip_gen: v7x
topology: tpu7x:2x2x1
jax: 0.10.0
libtpu: 0.0.40
codegen_flags: <defaults>
</compile_context>

<pallas_src>
import functools

import jax
import jax.numpy as jnp
from jax.experimental import pallas as pl
from jax.experimental.pallas import tpu as pltpu


def _round_up(n, m):
    return ((n + m - 1) // m) * m


def _chip_supports_bf16_math():
    """bf16 VPU/EUP exists on v6e / v7x; keep f32 tanh/bias math elsewhere."""
    try:
        kind = jax.devices()[0].device_kind.lower()
    except Exception:
        return False
    return any(tag in kind for tag in ("v6", "v7", "tpu7", "trillium", "ironwood"))


def policy_mean_kernel(x_ref, w1_ref, b1_ref, w2_ref, b2_ref, w3_ref, b3_ref,
                       mean_ref, *, n_split):
    """One batch block: mean = tanh(tanh(x@W1+b1)@W2+b2)@W3 + b3."""
    # Weights / biases are VMEM-resident across all grid steps (constant
    # index_map); load them once per step, outside the sub-block unroll.
    w1 = w1_ref[...]            # (F, H) f32  (first matmul stays f32, K tiny)
    w2 = w2_ref[...]            # (H, H) bf16
    w3 = w3_ref[...]            # (H, A) bf16
    b1 = b1_ref[...]            # (1, H) bf16 on v6e/v7x, f32 on v5e
    b2 = b2_ref[...]            # (1, H)
    b3 = b3_ref[...]            # (1, A) f32
    bf16_math = b1.dtype == jnp.bfloat16

    bb = x_ref.shape[0]
    rows = bb // n_split

    # Static unroll over independent batch sub-blocks so the LLO scheduler can
    # co-issue MXU pushes / EUP tanh / VPU bias-add from different sub-blocks.
    for s in range(n_split):
        sl = pl.ds(s * rows, rows)
        x = x_ref[sl, :]                                            # (rows, F) f32

        h1 = jnp.dot(x, w1, preferred_element_type=jnp.float32)     # (rows, H)
        if bf16_math:
            h1 = jnp.tanh(h1.astype(jnp.bfloat16) + b1)             # bf16 EUP/VPU
        else:
            h1 = jnp.tanh(h1 + b1).astype(jnp.bfloat16)             # f32 path (v5e)

        h2 = jnp.dot(h1, w2, preferred_element_type=jnp.float32)
        if bf16_math:
            h2 = jnp.tanh(h2.astype(jnp.bfloat16) + b2)
        else:
            h2 = jnp.tanh(h2 + b2).astype(jnp.bfloat16)

        mean = jnp.dot(h2, w3, preferred_element_type=jnp.float32)  # (rows, A)
        mean_ref[sl, :] = (mean + b3).astype(mean_ref.dtype)


def policy_forward(x, params, *, block_b=8192):
    """x: (B, num_inputs) float32. params: dict of (in, out)-layout weights.

    Returns (action_mean, action_log_std, action_std), each (B, num_outputs).
    """
    B, F = x.shape
    H = params["w1"].shape[1]
    A = params["w3"].shape[1]

    bf16_math = _chip_supports_bf16_math()

    # Batch tile: bb must be a multiple of 8 (or equal the padded batch).  For
    # non-trivial B, aim for ~4 grid steps so the pipeline double-buffers and
    # both v7x TensorCores get work; cap at block_b for VMEM.
    if B <= 16:
        bb = _round_up(B, 8)
    else:
        bb = max(8, min(block_b, _round_up(pl.cdiv(B, 4), 8)))
    B_pad = pl.cdiv(B, bb) * bb
    # Tail rows (if any) compute tanh(b1)-derived garbage that is sliced off
    # below and never read past row B.
    xp = x if B_pad == B else jnp.pad(x, ((0, B_pad - B), (0, 0)))

    # First matmul in f32 (K = F is tiny, removes bf16 input-rounding risk);
    # hidden matmuls feed the MXU in bf16 with f32 accumulation.
    w1 = params["w1"].astype(jnp.float32)
    w2 = params["w2"].astype(jnp.bfloat16)
    w3 = params["w3"].astype(jnp.bfloat16)
    bias_dt = jnp.bfloat16 if bf16_math else jnp.float32
    b1 = params["b1"].astype(bias_dt)
    b2 = params["b2"].astype(bias_dt)
    b3 = params["b3"].astype(jnp.float32)

    # Interleave two independent halves per step only when the block is big
    # enough for each half to stay sublane-aligned and worth the unroll.
    n_split = 2 if (bb >= 512 and bb % 16 == 0) else 1

    # VMEM budget: double-buffered x / mean blocks + resident weights + a few
    # (bb, H) f32-class activation temporaries per step.
    est = (2 * bb * F * 4 + 2 * bb * A * 4
           + 2 * (F * H * 4 + H * H * 2 + H * A * 2 + 3 * H * 4)
           + 6 * bb * H * 4)
    vmem_limit = int(min(max(2 * est, 16 << 20), 64 << 20))

    resident = lambda shape: pl.BlockSpec(shape, lambda i: (0, 0))
    kernel = functools.partial(policy_mean_kernel, n_split=n_split)

    mean_pad = pl.pallas_call(
        kernel,
        out_shape=jax.ShapeDtypeStruct((B_pad, A), jnp.float32),
        grid=(B_pad // bb,),
        in_specs=[
            pl.BlockSpec((bb, F), lambda i: (i, 0)),   # x: tiled over batch
            resident((F, H)), resident((1, H)),        # W1, b1 (VMEM resident)
            resident((H, H)), resident((1, H)),        # W2, b2
            resident((H, A)), resident((1, A)),        # W3, b3 (no lane padding)
        ],
        out_specs=pl.BlockSpec((bb, A), lambda i: (i, 0)),
        compiler_params=pltpu.CompilerParams(
            dimension_semantics=("parallel",),         # megacore split on v7x
            vmem_limit_bytes=vmem_limit),
    )(xp, w1, b1, w2, b2, w3, b3)

    action_mean = mean_pad if B_pad == B else mean_pad[:B]

    # action_log_std / action_std carry no per-row information: broadcast and
    # exp once in the wrapper instead of writing (B, A) of redundant data.
    log_std = params["log_std"].astype(jnp.float32)            # (1, A)
    action_log_std = jnp.broadcast_to(log_std, (B, A))
    action_std = jnp.broadcast_to(jnp.exp(log_std), (B, A))
    return action_mean, action_log_std, action_std


def init_policy_params(key, num_inputs, num_outputs, hidden=64):
    """Mimics PyTorch nn.Linear defaults (uniform(-1/sqrt(fan_in), ...)) plus the
    module's custom scaling: action_mean.weight *= 0.1, action_mean.bias *= 0."""
    ks = jax.random.split(key, 6)

    def linear(kw, kb, fan_in, fan_out):
        bound = 1.0 / jnp.sqrt(fan_in)
        w = jax.random.uniform(kw, (fan_in, fan_out), jnp.float32, -bound, bound)
        b = jax.random.uniform(kb, (1, fan_out), jnp.float32, -bound, bound)
        return w, b

    w1, b1 = linear(ks[0], ks[1], num_inputs, hidden)
    w2, b2 = linear(ks[2], ks[3], hidden, hidden)
    w3, b3 = linear(ks[4], ks[5], hidden, num_outputs)
    w3 = w3 * 0.1
    b3 = b3 * 0.0
    log_std = jnp.zeros((1, num_outputs), jnp.float32)
    return dict(w1=w1, b1=b1, w2=w2, b2=b2, w3=w3, b3=b3, log_std=log_std)


def policy_forward_ref(x, p):
    h1 = jnp.tanh(x @ p["w1"] + p["b1"])
    h2 = jnp.tanh(h1 @ p["w2"] + p["b2"])
    mean = h2 @ p["w3"] + p["b3"]
    logstd = jnp.broadcast_to(p["log_std"], mean.shape)
    return mean, logstd, jnp.exp(logstd)


if __name__ == "__main__":
    # LunarLanderContinuous-v2: observation dim 8, action dim 2.
    # TODO(synk): the module's `old=True` snapshot path and the gym env setup
    # have no kernel equivalent; call policy_forward with a stashed params dict.
    num_inputs, num_outputs, batch = 8, 2, 8

    key = jax.random.PRNGKey(0)
    k_params, k_x = jax.random.split(key)
    params = init_policy_params(k_params, num_inputs, num_outputs)
    x = jax.random.normal(k_x, (batch, num_inputs), jnp.float32)

    fwd = jax.jit(policy_forward)   # fuse the (rare) pad / dtype casts
    mean, logstd, std = fwd(x, params)
    jax.block_until_ready((mean, logstd, std))

    mean_r, logstd_r, std_r = policy_forward_ref(x, params)
    # Hidden matmuls / tanh run with bf16 operands (f32 accumulation), so
    # compare against the pure-f32 reference with bf16-class tolerance.
    assert mean.shape == (batch, num_outputs)
    assert jnp.allclose(mean, mean_r, atol=2e-2, rtol=2e-2), "action_mean mismatch"
    assert jnp.allclose(logstd, logstd_r, atol=1e-6), "action_log_std mismatch"
    assert jnp.allclose(std, std_r, atol=1e-6), "action_std mismatch"

    print("KERNEL_OK")
</pallas_src>

<mosaic_0001>
module attributes {stable_mosaic.version = 11 : i64} {
  func.func @policy_mean_kernel(%arg0: i32, %arg1: memref<8x8xf32, #tpu.memory_space<vmem>>, %arg2: memref<8x64xf32, #tpu.memory_space<vmem>>, %arg3: memref<1x64xf32, #tpu.memory_space<vmem>>, %arg4: memref<64x64xbf16, #tpu.memory_space<vmem>>, %arg5: memref<1x64xf32, #tpu.memory_space<vmem>>, %arg6: memref<64x2xbf16, #tpu.memory_space<vmem>>, %arg7: memref<1x2xf32, #tpu.memory_space<vmem>>, %arg8: memref<8x2xf32, #tpu.memory_space<vmem>>) attributes {dimension_semantics = [#tpu.dimension_semantics<parallel>], iteration_bounds = array<i64: 1>, scalar_prefetch = 0 : i64, scratch_operands = 0 : i64, tpu.core_type = #tpu.core_type<tc>, window_params = [{transform_indices = @transform_0, window_bounds = array<i64: 8, 8>}, {pipeline_mode = #tpu.pipeline_mode<synchronous>, transform_indices = @transform_1, window_bounds = array<i64: 8, 64>}, {pipeline_mode = #tpu.pipeline_mode<synchronous>, transform_indices = @transform_2, window_bounds = array<i64: 1, 64>}, {pipeline_mode = #tpu.pipeline_mode<synchronous>, transform_indices = @transform_3, window_bounds = array<i64: 64, 64>}, {pipeline_mode = #tpu.pipeline_mode<synchronous>, transform_indices = @transform_4, window_bounds = array<i64: 1, 64>}, {pipeline_mode = #tpu.pipeline_mode<synchronous>, transform_indices = @transform_5, window_bounds = array<i64: 64, 2>}, {pipeline_mode = #tpu.pipeline_mode<synchronous>, transform_indices = @transform_6, window_bounds = array<i64: 1, 2>}, {transform_indices = @transform_7, window_bounds = array<i64: 8, 2>}]} {
    %c0 = arith.constant 0 : index
    %c0_0 = arith.constant 0 : index
    %0 = vector.load %arg2[%c0, %c0_0] : memref<8x64xf32, #tpu.memory_space<vmem>>, vector<8x64xf32>
    %c0_1 = arith.constant 0 : index
    %c0_2 = arith.constant 0 : index
    %1 = vector.load %arg4[%c0_1, %c0_2] : memref<64x64xbf16, #tpu.memory_space<vmem>>, vector<64x64xbf16>
    %c0_3 = arith.constant 0 : index
    %c0_4 = arith.constant 0 : index
    %2 = vector.load %arg6[%c0_3, %c0_4] : memref<64x2xbf16, #tpu.memory_space<vmem>>, vector<64x2xbf16>
    %c0_5 = arith.constant 0 : index
    %c0_6 = arith.constant 0 : index
    %3 = vector.load %arg3[%c0_5, %c0_6] : memref<1x64xf32, #tpu.memory_space<vmem>>, vector<1x64xf32>
    %c0_7 = arith.constant 0 : index
    %c0_8 = arith.constant 0 : index
    %4 = vector.load %arg5[%c0_7, %c0_8] : memref<1x64xf32, #tpu.memory_space<vmem>>, vector<1x64xf32>
    %c0_9 = arith.constant 0 : index
    %c0_10 = arith.constant 0 : index
    %5 = vector.load %arg7[%c0_9, %c0_10] : memref<1x2xf32, #tpu.memory_space<vmem>>, vector<1x2xf32>
    %c0_11 = arith.constant 0 : index
    %c0_12 = arith.constant 0 : index
    %6 = vector.load %arg1[%c0_11, %c0_12] : memref<8x8xf32, #tpu.memory_space<vmem>>, vector<8x8xf32>
    %cst = arith.constant dense<0.000000e+00> : vector<8x64xf32>
    %7 = tpu.matmul %6, %0, %cst {dimension_numbers = #tpu.dot_dimension_numbers<[1], [0], [0], [1], [0, 0, 1, 1], [], []>} : vector<8x8xf32>, vector<8x64xf32>, vector<8x64xf32> -> vector<8x64xf32>
    %8 = vector.broadcast %3 : vector<1x64xf32> to vector<8x64xf32>
    %9 = arith.addf %7, %8 : vector<8x64xf32>
    %10 = math.tanh %9 : vector<8x64xf32>
    %11 = arith.truncf %10 : vector<8x64xf32> to vector<8x64xbf16>
    %cst_13 = arith.constant dense<0.000000e+00> : vector<8x64xf32>
    %12 = tpu.matmul %11, %1, %cst_13 {dimension_numbers = #tpu.dot_dimension_numbers<[1], [0], [0], [1], [0, 0, 1, 1], [], []>} : vector<8x64xbf16>, vector<64x64xbf16>, vector<8x64xf32> -> vector<8x64xf32>
    %13 = vector.broadcast %4 : vector<1x64xf32> to vector<8x64xf32>
    %14 = arith.addf %12, %13 : vector<8x64xf32>
    %15 = math.tanh %14 : vector<8x64xf32>
    %16 = arith.truncf %15 : vector<8x64xf32> to vector<8x64xbf16>
    %cst_14 = arith.constant dense<0.000000e+00> : vector<8x2xf32>
    %17 = tpu.matmul %16, %2, %cst_14 {dimension_numbers = #tpu.dot_dimension_numbers<[1], [0], [0], [1], [0, 0, 1, 1], [], []>} : vector<8x64xbf16>, vector<64x2xbf16>, vector<8x2xf32> -> vector<8x2xf32>
    %18 = vector.broadcast %5 : vector<1x2xf32> to vector<8x2xf32>
    %19 = arith.addf %17, %18 : vector<8x2xf32>
    %c0_15 = arith.constant 0 : index
    %c0_16 = arith.constant 0 : index
    %20 = vector.load %arg8[%c0_15, %c0_16] : memref<8x2xf32, #tpu.memory_space<vmem>>, vector<8x2xf32>
    tpu.vector_store %arg8[%c0_15, %c0_16], %19 {strides = array<i32>} : memref<8x2xf32, #tpu.memory_space<vmem>>, vector<8x2xf32>,
    return
  }
  func.func @transform_0(%arg0: i32) -> (i32, i32) {
    %c0_i32 = arith.constant 0 : i32
    %c0_i32_0 = arith.constant 0 : i32
    return %arg0, %c0_i32 : i32, i32
  }
  func.func @transform_1(%arg0: i32) -> (i32, i32) {
    %c0_i32 = arith.constant 0 : i32
    %c0_i32_0 = arith.constant 0 : i32
    %c0_i32_1 = arith.constant 0 : i32
    return %c0_i32, %c0_i32_0 : i32, i32
  }
  func.func @transform_2(%arg0: i32) -> (i32, i32) {
    %c0_i32 = arith.constant 0 : i32
    %c0_i32_0 = arith.constant 0 : i32
    %c0_i32_1 = arith.constant 0 : i32
    return %c0_i32, %c0_i32_0 : i32, i32
  }
  func.func @transform_3(%arg0: i32) -> (i32, i32) {
    %c0_i32 = arith.constant 0 : i32
    %c0_i32_0 = arith.constant 0 : i32
    %c0_i32_1 = arith.constant 0 : i32
    return %c0_i32, %c0_i32_0 : i32, i32
  }
  func.func @transform_4(%arg0: i32) -> (i32, i32) {
    %c0_i32 = arith.constant 0 : i32
    %c0_i32_0 = arith.constant 0 : i32
    %c0_i32_1 = arith.constant 0 : i32
    return %c0_i32, %c0_i32_0 : i32, i32
  }
  func.func @transform_5(%arg0: i32) -> (i32, i32) {
    %c0_i32 = arith.constant 0 : i32
    %c0_i32_0 = arith.constant 0 : i32
    %c0_i32_1 = arith.constant 0 : i32
    return %c0_i32, %c0_i32_0 : i32, i32
  }
  func.func @transform_6(%arg0: i32) -> (i32, i32) {
    %c0_i32 = arith.constant 0 : i32
    %c0_i32_0 = arith.constant 0 : i32
    %c0_i32_1 = arith.constant 0 : i32
    return %c0_i32, %c0_i32_0 : i32, i32
  }
  func.func @transform_7(%arg0: i32) -> (i32, i32) {
    %c0_i32 = arith.constant 0 : i32
    %c0_i32_0 = arith.constant 0 : i32
    return %arg0, %c0_i32 : i32, i32
  }
}

</mosaic_0001>

<llo_original>
// kernel: policy_forward.1
$region0: #{policy_forward.1}
  #allocation0 [shape = 'u32[]', space=smem, size = 0x4, offset = 0x4, fixed_abs, tag = 'smem constant byte address 0x4 - core index']
  #allocation1 [shape = 'u32[144,128]{1,0:T(1,128)}', space=vmem, size = 0x12000, scoped, tag = 'internal scratch']
  %s0 = inlined_call_operand.vmem [shape: f32[8,8], index: 0, kind: input, shape index: {}]
  %s1 = inlined_call_operand.vmem [shape: f32[8,64], index: 1, kind: input, shape index: {}]
  %s2 = inlined_call_operand.vmem [shape: f32[1,64], index: 2, kind: input, shape index: {}]
  %s3 = inlined_call_operand.vmem [shape: bf16[64,64], index: 3, kind: input, shape index: {}]
  %s4 = inlined_call_operand.vmem [shape: f32[1,64], index: 4, kind: input, shape index: {}]
  %s5 = inlined_call_operand.vmem [shape: bf16[64,2], index: 5, kind: input, shape index: {}]
  %s6 = inlined_call_operand.vmem [shape: f32[1,2], index: 6, kind: input, shape index: {}]
  %s7 = inlined_call_operand.vmem [shape: f32[8,2], index: 7, kind: output, shape index: {}]
  %s8 = sld [smem:[#allocation0]]
  $region38: #{policy_forward.1} parent=0
    _
  %s10 = ssub.s32 1, %s8
  %s11 = scalar_select 0, %s10, %s8
  // Predicated region
  $region2: #{policy_forward.1} parent=0 // pred_check
    _
  $region3: #{policy_forward.1} parent=0 // pred_check_branch
    %13 = sbr.rel (0) target = $region5
  $region4: #{policy_forward.1} parent=0 // pred_region
    _
  $region5: #{policy_forward.1} parent=0 // pred_fallthru
    _
  // Predicated region
  $region6: #{policy_forward.1} parent=0 // pred_check
    _
  $region7: #{policy_forward.1} parent=0 // pred_check_branch
    %15 = sbr.rel (0) target = $region9
  $region8: #{policy_forward.1} parent=0 // pred_region
    _
  $region9: #{policy_forward.1} parent=0 // pred_fallthru
    _
  // Predicated region
  $region10: #{policy_forward.1} parent=0 // pred_check
    _
  $region11: #{policy_forward.1} parent=0 // pred_check_branch
    %17 = sbr.rel (0) target = $region13
  $region12: #{policy_forward.1} parent=0 // pred_region
    _
  $region13: #{policy_forward.1} parent=0 // pred_fallthru
    _
  // Predicated region
  $region14: #{policy_forward.1} parent=0 // pred_check
    _
  $region15: #{policy_forward.1} parent=0 // pred_check_branch
    %19 = sbr.rel (0) target = $region17
  $region16: #{policy_forward.1} parent=0 // pred_region
    _
  $region17: #{policy_forward.1} parent=0 // pred_fallthru
    _
  // Predicated region
  $region18: #{policy_forward.1} parent=0 // pred_check
    _
  $region19: #{policy_forward.1} parent=0 // pred_check_branch
    %21 = sbr.rel (0) target = $region21
  $region20: #{policy_forward.1} parent=0 // pred_region
    _
  $region21: #{policy_forward.1} parent=0 // pred_fallthru
    _
  // Predicated region
  $region22: #{policy_forward.1} parent=0 // pred_check
    _
  $region23: #{policy_forward.1} parent=0 // pred_check_branch
    %23 = sbr.rel (0) target = $region25
  $region24: #{policy_forward.1} parent=0 // pred_region
    _
  $region25: #{policy_forward.1} parent=0 // pred_fallthru
    _
  // Predicated region
  $region26: #{policy_forward.1} parent=0 // pred_check
    _
  $region27: #{policy_forward.1} parent=0 // pred_check_branch
    %25 = sbr.rel (0) target = $region29
  $region28: #{policy_forward.1} parent=0 // pred_region
    _
  $region29: #{policy_forward.1} parent=0 // pred_fallthru
    _
  %v27 = vld [vmem:[%s1] sm:$0xff]
  %v28 = vld [vmem:[%s3] sm:$0xf]
  %v29 = vld [vmem:[%s3 + $0x4] sm:$0xf]
  %v30 = vld [vmem:[%s3 + $0x8] sm:$0xf]
  %v31 = vld [vmem:[%s3 + $0xc] sm:$0xf]
  %v32 = vld [vmem:[%s3 + $0x10] sm:$0xf]
  %v33 = vld [vmem:[%s3 + $0x14] sm:$0xf]
  %v34 = vld [vmem:[%s3 + $0x18] sm:$0xf]
  %v35 = vld [vmem:[%s3 + $0x1c] sm:$0xf]
  %v36 = vld [vmem:[%s5] sm:$0xf]
  %v37 = vld [vmem:[%s5 + $0x4] sm:$0xf]
  %v38 = vld [vmem:[%s5 + $0x8] sm:$0xf]
  %v39 = vld [vmem:[%s5 + $0xc] sm:$0xf]
  %v40 = vld [vmem:[%s5 + $0x10] sm:$0xf]
  %v41 = vld [vmem:[%s5 + $0x14] sm:$0xf]
  %v42 = vld [vmem:[%s5 + $0x18] sm:$0xf]
  %v43 = vld [vmem:[%s5 + $0x1c] sm:$0xf]
  %v44 = vld [vmem:[%s2] sm:$0x1]
  %v45 = vld [vmem:[%s4] sm:$0x1]
  %v46 = vld [vmem:[%s6] sm:$0x1]
  %v47 = vld [vmem:[%s0] sm:$0xff]
  %v49 = vlaneseq
  %v50 = vshrl.u32 %v49, 7
  %v51 = vsub.s32 0, %v50
  %v52 = vrot.slane %v44, %v51
  %vm54 = vcmask 64512
  %v56 = vsel %vm54, %v47, 0
  %58 = vmatprep.subr.mxu0 0.0
  %59 = vmatpush1.msra.mxu0 %v27
  %60 = vmatprep.subr.mxu0 0.0
  %61 = vmatpush1.msra.mxu0 0.0
  %62 = vmatprep.subr.mxu0 0.0
  %63 = vmatpush1.msra.mxu0 0.0
  %64 = vmatprep.subr.mxu0 0.0
  %65 = vmatpush1.msra.mxu0 0.0
  %66 = vmatprep.subr.mxu0 0.0
  %67 = vmatpush1.msra.mxu0 0.0
  %68 = vmatprep.subr.mxu0 0.0
  %69 = vmatpush1.msra.mxu0 0.0
  %70 = vmatprep.subr.mxu0 0.0
  %71 = vmatpush1.msra.mxu0 0.0
  %72 = vmatprep.subr.mxu0 0.0
  %73 = vmatpush1.msra.mxu0 0.0
  %74 = vmatprep.subr.mxu0 0.0
  %75 = vmatpush1.msra.mxu0 0.0
  %76 = vmatprep.subr.mxu0 0.0
  %77 = vmatpush1.msra.mxu0 0.0
  %78 = vmatprep.subr.mxu0 0.0
  %79 = vmatpush1.msra.mxu0 0.0
  %80 = vmatprep.subr.mxu0 0.0
  %81 = vmatpush1.msra.mxu0 0.0
  %82 = vmatprep.subr.mxu0 0.0
  %83 = vmatpush1.msra.mxu0 0.0
  %84 = vmatprep.subr.mxu0 0.0
  %85 = vmatpush1.msra.mxu0 0.0
  %86 = vmatprep.subr.mxu0 0.0
  %87 = vmatpush1.msra.mxu0 0.0
  %88 = vmatprep.subr.mxu0 0.0
  %89 = vmatpush1.msra.mxu0 0.0
  %90 = vmatprep.subr.mxu0 0.0
  %91 = vmatpush1.msra.mxu0 0.0
  %92 = vmatprep.subr.mxu0 0.0
  %93 = vmatpush1.msra.mxu0 0.0
  %94 = vmatprep.subr.mxu0 0.0
  %95 = vmatpush1.msra.mxu0 0.0
  %96 = vmatprep.subr.mxu0 0.0
  %97 = vmatpush1.msra.mxu0 0.0
  %98 = vmatprep.subr.mxu0 0.0
  %99 = vmatpush1.msra.mxu0 0.0
  %100 = vmatprep.subr.mxu0 0.0
  %101 = vmatpush1.msra.mxu0 0.0
  %102 = vmatprep.subr.mxu0 0.0
  %103 = vmatpush1.msra.mxu0 0.0
  %104 = vmatprep.subr.mxu0 0.0
  %105 = vmatpush1.msra.mxu0 0.0
  %106 = vmatprep.subr.mxu0 0.0
  %107 = vmatpush1.msra.mxu0 0.0
  %108 = vmatprep.subr.mxu0 0.0
  %109 = vmatpush1.msra.mxu0 0.0
  %110 = vmatprep.subr.mxu0 0.0
  %111 = vmatpush1.msra.mxu0 0.0
  %112 = vmatprep.subr.mxu0 0.0
  %113 = vmatpush1.msra.mxu0 0.0
  %114 = vmatprep.subr.mxu0 0.0
  %115 = vmatpush1.msra.mxu0 0.0
  %116 = vmatprep.subr.mxu0 0.0
  %117 = vmatpush1.msra.mxu0 0.0
  %118 = vmatprep.subr.mxu0 0.0
  %119 = vmatpush1.msra.mxu0 0.0
  %120 = vmatprep.subr.mxu0 0.0
  %121 = vmatpush1.msra.mxu0 0.0
  %122 = vmatprep.mubr.f32.mxu0 0.0
  %123 = vmatmul.mubr.f32.gmra.mrb[0].mxu0 %v56
  %v124 = vpop.f32.mrb[0].mxu0
  %v125 = vadd.f32 %v52, %v124
  %v126 = vpop.f32.mrb[0].mxu0
  %127 = vdwg.mxu0
  %v128 = vtanh.pop %v125
  %v129 = vpack.c.bf16 %v128, %v128
  %v131 = vlaneseq
  %v132 = vshrl.u32 %v131, 7
  %v133 = vsub.s32 0, %v132
  %v134 = vrot.slane %v45, %v133
  %v144 = vunpack.c.l.b16 %v28
  %v145 = vunpack.c.l.b16 %v29
  %v146 = vunpack.c.l.b16 %v30
  %v147 = vunpack.c.l.b16 %v31
  %v148 = vunpack.c.l.b16 %v32
  %v149 = vunpack.c.l.b16 %v33
  %v150 = vunpack.c.l.b16 %v34
  %v151 = vunpack.c.l.b16 %v35
  %v152 = vpack.c.b16 %v145, %v144
  %v153 = vpack.c.b16 %v147, %v146
  %v154 = vpack.c.b16 %v149, %v148
  %v155 = vpack.c.b16 %v151, %v150
  %vm160 = vcmask 523264
  %v162 = vsel %vm160, %v129, 0
  %164 = vmatprep.subr.bf16.mxu0 0
  %165 = vmatpush1.bf16.msra.mxu0 %v152
  %166 = vmatprep.subr.bf16.mxu0 0
  %167 = vmatpush1.bf16.msra.mxu0 %v153
  %168 = vmatprep.subr.bf16.mxu0 0
  %169 = vmatpush1.bf16.msra.mxu0 %v154
  %170 = vmatprep.subr.bf16.mxu0 0
  %171 = vmatpush1.bf16.msra.mxu0 %v155
  %172 = vmatprep.subr.bf16.mxu0 0
  %173 = vmatpush1.bf16.msra.mxu0 0
  %174 = vmatprep.subr.bf16.mxu0 0
  %175 = vmatpush1.bf16.msra.mxu0 0
  %176 = vmatprep.subr.bf16.mxu0 0
  %177 = vmatpush1.bf16.msra.mxu0 0
  %178 = vmatprep.subr.bf16.mxu0 0
  %179 = vmatpush1.bf16.msra.mxu0 0
  %180 = vmatprep.subr.bf16.mxu0 0
  %181 = vmatpush1.bf16.msra.mxu0 0
  %182 = vmatprep.subr.bf16.mxu0 0
  %183 = vmatpush1.bf16.msra.mxu0 0
  %184 = vmatprep.subr.bf16.mxu0 0
  %185 = vmatpush1.bf16.msra.mxu0 0
  %186 = vmatprep.subr.bf16.mxu0 0
  %187 = vmatpush1.bf16.msra.mxu0 0
  %188 = vmatprep.subr.bf16.mxu0 0
  %189 = vmatpush1.bf16.msra.mxu0 0
  %190 = vmatprep.subr.bf16.mxu0 0
  %191 = vmatpush1.bf16.msra.mxu0 0
  %192 = vmatprep.subr.bf16.mxu0 0
  %193 = vmatpush1.bf16.msra.mxu0 0
  %194 = vmatprep.subr.bf16.mxu0 0
  %195 = vmatpush1.bf16.msra.mxu0 0
  %196 = vmatprep.mubr.bf16.mxu0 0
  %197 = vmatmul.mubr.bf16.gmra.mrb[0].mxu0 %v162
  %v198 = vpop.f32.mrb[0].mxu0
  %v199 = vadd.f32 %v134, %v198
  %v200 = vpop.f32.mrb[0].mxu0
  %v201 = vpop.f32.mrb[0].mxu0
  %v202 = vpop.f32.mrb[0].mxu0
  %203 = vdwg.mxu0
  %v204 = vtanh.pop %v199
  %v205 = vpack.c.bf16 %v204, %v204
  %v207 = vlaneseq
  %v208 = vshrl.u32 %v207, 7
  %v209 = vsub.s32 0, %v208
  %v210 = vrot.slane %v46, %v209
  %v220 = vunpack.c.l.b16 %v36
  %v221 = vunpack.c.l.b16 %v37
  %v222 = vunpack.c.l.b16 %v38
  %v223 = vunpack.c.l.b16 %v39
  %v224 = vunpack.c.l.b16 %v40
  %v225 = vunpack.c.l.b16 %v41
  %v226 = vunpack.c.l.b16 %v42
  %v227 = vunpack.c.l.b16 %v43
  %v228 = vpack.c.b16 %v221, %v220
  %v229 = vpack.c.b16 %v223, %v222
  %v230 = vpack.c.b16 %v225, %v224
  %v231 = vpack.c.b16 %v227, %v226
  %v237 = vsel %vm160, %v205, 0
  %239 = vmatprep.subr.bf16.mxu0 0
  %240 = vmatpush1.bf16.msra.mxu0 %v228
  %241 = vmatprep.subr.bf16.mxu0 0
  %242 = vmatpush1.bf16.msra.mxu0 %v229
  %243 = vmatprep.subr.bf16.mxu0 0
  %244 = vmatpush1.bf16.msra.mxu0 %v230
  %245 = vmatprep.subr.bf16.mxu0 0
  %246 = vmatpush1.bf16.msra.mxu0 %v231
  %247 = vmatprep.subr.bf16.mxu0 0
  %248 = vmatpush1.bf16.msra.mxu0 0
  %249 = vmatprep.subr.bf16.mxu0 0
  %250 = vmatpush1.bf16.msra.mxu0 0
  %251 = vmatprep.subr.bf16.mxu0 0
  %252 = vmatpush1.bf16.msra.mxu0 0
  %253 = vmatprep.subr.bf16.mxu0 0
  %254 = vmatpush1.bf16.msra.mxu0 0
  %255 = vmatprep.subr.bf16.mxu0 0
  %256 = vmatpush1.bf16.msra.mxu0 0
  %257 = vmatprep.subr.bf16.mxu0 0
  %258 = vmatpush1.bf16.msra.mxu0 0
  %259 = vmatprep.subr.bf16.mxu0 0
  %260 = vmatpush1.bf16.msra.mxu0 0
  %261 = vmatprep.subr.bf16.mxu0 0
  %262 = vmatpush1.bf16.msra.mxu0 0
  %263 = vmatprep.subr.bf16.mxu0 0
  %264 = vmatpush1.bf16.msra.mxu0 0
  %265 = vmatprep.subr.bf16.mxu0 0
  %266 = vmatpush1.bf16.msra.mxu0 0
  %267 = vmatprep.subr.bf16.mxu0 0
  %268 = vmatpush1.bf16.msra.mxu0 0
  %269 = vmatprep.subr.bf16.mxu0 0
  %270 = vmatpush1.bf16.msra.mxu0 0
  %271 = vmatprep.mubr.bf16.mxu0 0
  %272 = vmatmul.mubr.bf16.gmra.mrb[0].mxu0 %v237
  %v273 = vpop.f32.mrb[0].mxu0
  %v274 = vadd.f32 %v210, %v273
  %v275 = vpop.f32.mrb[0].mxu0
  %v276 = vpop.f32.mrb[0].mxu0
  %v277 = vpop.f32.mrb[0].mxu0
  %278 = vdwg.mxu0
  %vm279 = vcmask 15360
  %280 = vst.msk [vmem:[%s7] sm:$0xff] %vm279, %v274
  // Predicated region
  $region30: #{policy_forward.1} parent=0 // pred_check
    _
  $region31: #{policy_forward.1} parent=0 // pred_check_branch
    %282 = sbr.rel (0) target = $region33
  $region32: #{policy_forward.1} parent=0 // pred_region
    _
  $region33: #{policy_forward.1} parent=0 // pred_fallthru
    _
  // Predicated region
  $region34: #{policy_forward.1} parent=0 // pred_check
    _
  $region35: #{policy_forward.1} parent=0 // pred_check_branch
    %284 = sbr.rel (0) target = $region37
  $region36: #{policy_forward.1} parent=0 // pred_region
    _
  $region37: #{policy_forward.1} parent=0 // pred_fallthru
    _

</llo_original>
